<compile_context>
chip_gen: v5e
topology: v5e:2x2
jax: 0.10.0
libtpu: 0.0.40
codegen_flags: <defaults>
</compile_context>

<pallas_src>
import jax
import jax.numpy as jnp
from jax.experimental import pallas as pl
from jax.experimental.pallas import tpu as pltpu


_LANE = 128        # lane width: batch tiles must be multiples of this
_MAX_TB = 1024     # batch tile; large tiles amortize ~0.35us/step grid overhead


def _round_up(n, m):
    return ((n + m - 1) // m) * m


def _mlp_kernel(x_ref, w1_ref, b1_ref, w2_ref, b2_ref, w3_ref, b3_ref, o_ref):
    """Fused 3-layer MLP on one batch tile, batch on the lane axis.

    x_ref : (3, TB)   activations, batch-on-lane (lane dense)
    w1    : (N, 3)    b1 : (N, 1)
    w2    : (N, N)    b2 : (N, 1)
    w3    : (1, N)    b3 : (1, 1)
    o_ref : (1, TB)   lane-dense output row
    """
    x = x_ref[...]                                  # (3, TB)
    w1 = w1_ref[...]                                # (N, 3)

    # Layer 1: K=3 contraction -> 3 VPU broadcast FMAs (MXU would waste its
    # 128/256-deep systolic array and still pay full push/pop latency).
    h1 = (w1[:, 0:1] * x[0:1, :]
          + w1[:, 1:2] * x[1:2, :]
          + w1[:, 2:3] * x[2:3, :]
          + b1_ref[...])                            # (N, TB)
    h1 = jnp.maximum(h1, 0.0)

    # Layer 2: the only real matmul -> MXU with f32 accumulation.
    # TODO(synk): if `neurons` were free to choose, a multiple of 128 (or bf16
    # weights on v6e/v7x) would use the MXU contraction depth better.
    h2 = jnp.dot(w2_ref[...], h1, preferred_element_type=jnp.float32) + b2_ref[...]
    h2 = jnp.maximum(h2, 0.0)

    # Layer 3: (1, N) @ (N, TB) -> lane-dense (1, TB) output row.
    o_ref[...] = (
        jnp.dot(w3_ref[...], h2, preferred_element_type=jnp.float32) + b3_ref[...]
    )


@jax.jit
def network_forward(x, params):
    """x: (B, 3) float32. params: PyTorch-convention (out, in) weights + (out,) biases."""
    w1, b1 = params["w1"], params["b1"]
    w2, b2 = params["w2"], params["b2"]
    w3, b3 = params["w3"], params["b3"]
    neurons = w1.shape[0]

    B = x.shape[0]
    tb = min(_MAX_TB, _round_up(B, _LANE))          # batch tile (multiple of 128)
    b_pad = _round_up(B, tb)                        # pad batch to a whole tile
    grid = (b_pad // tb,)

    # Layout plumbing (fused under jit, cheap): batch goes on the lane axis,
    # biases become (out, 1) columns so they broadcast along lanes in-kernel.
    # Note: batch-on-lane means the PyTorch (out, in) weights need NO transpose.
    x_t = jnp.pad(x.astype(jnp.float32).T, ((0, 0), (0, b_pad - B)))  # (3, B_pad)
    b1c = b1[:, None]
    b2c = b2[:, None]
    b3c = b3[:, None]

    resident = lambda i: (0, 0)  # same block every step -> stays VMEM-resident

    y_t = pl.pallas_call(
        _mlp_kernel,
        out_shape=jax.ShapeDtypeStruct((1, b_pad), jnp.float32),
        grid=grid,
        in_specs=[
            pl.BlockSpec((3, tb), lambda i: (0, i)),        # x tile (pipelined)
            pl.BlockSpec((neurons, 3), resident),           # w1
            pl.BlockSpec((neurons, 1), resident),           # b1
            pl.BlockSpec((neurons, neurons), resident),     # w2
            pl.BlockSpec((neurons, 1), resident),           # b2
            pl.BlockSpec((1, neurons), resident),           # w3
            pl.BlockSpec((1, 1), resident),                 # b3
        ],
        out_specs=pl.BlockSpec((1, tb), lambda i: (0, i)),
        compiler_params=pltpu.CompilerParams(
            dimension_semantics=("parallel",),   # shard batch grid across TCs (v7x)
            vmem_limit_bytes=16 * 1024 * 1024,   # explicit; actual footprint << 1 MiB
        ),
    )(x_t, w1, b1c, w2, b2c, w3, b3c)

    return y_t[:, :B].T                                     # (B, 1)


def init_params(key, neurons):
    """Deterministic init matching nn.Linear shapes (uniform +/- 1/sqrt(fan_in))."""
    ks = jax.random.split(key, 6)

    def lin(kw, kb, fan_in, fan_out):
        bound = 1.0 / jnp.sqrt(jnp.float32(fan_in))
        w = jax.random.uniform(kw, (fan_out, fan_in), jnp.float32, -bound, bound)
        b = jax.random.uniform(kb, (fan_out,), jnp.float32, -bound, bound)
        return w, b

    w1, b1 = lin(ks[0], ks[1], 3, neurons)
    w2, b2 = lin(ks[2], ks[3], neurons, neurons)
    w3, b3 = lin(ks[4], ks[5], neurons, 1)
    return {"w1": w1, "b1": b1, "w2": w2, "b2": b2, "w3": w3, "b3": b3}


def reference_forward(x, p):
    # Mathematically identical to the PyTorch Network.forward (y = x W^T + b per
    # layer); written in the same batch-on-lane orientation / op order as the
    # kernel so the self-test is insensitive to backend matmul-precision defaults.
    xt = x.T                                                     # (3, B)
    w1 = p["w1"]
    h1 = (w1[:, 0:1] * xt[0:1, :]
          + w1[:, 1:2] * xt[1:2, :]
          + w1[:, 2:3] * xt[2:3, :]
          + p["b1"][:, None])
    h1 = jnp.maximum(h1, 0.0)
    h2 = jnp.maximum(jnp.dot(p["w2"], h1) + p["b2"][:, None], 0.0)
    y = jnp.dot(p["w3"], h2) + p["b3"][:, None]
    return y.T                                                   # (B, 1)


if __name__ == "__main__":
    key = jax.random.PRNGKey(0)
    k_x, k_p = jax.random.split(key)

    batch, neurons = 8, 32
    x = jax.random.normal(k_x, (batch, 3), dtype=jnp.float32)
    params = init_params(k_p, neurons)

    out = jax.block_until_ready(network_forward(x, params))

    ref = reference_forward(x, params)
    assert out.shape == (batch, 1)
    assert jnp.allclose(out, ref, atol=1e-4, rtol=1e-4)
    print("KERNEL_OK")
</pallas_src>

<mosaic_0001>
module attributes {stable_mosaic.version = 11 : i64} {
  func.func @_mlp_kernel(%arg0: i32, %arg1: memref<3x128xf32, #tpu.memory_space<vmem>>, %arg2: memref<32x3xf32, #tpu.memory_space<vmem>>, %arg3: memref<32x1xf32, #tpu.memory_space<vmem>>, %arg4: memref<32x32xf32, #tpu.memory_space<vmem>>, %arg5: memref<32x1xf32, #tpu.memory_space<vmem>>, %arg6: memref<1x32xf32, #tpu.memory_space<vmem>>, %arg7: memref<1x1xf32, #tpu.memory_space<vmem>>, %arg8: memref<1x128xf32, #tpu.memory_space<vmem>>) attributes {dimension_semantics = [#tpu.dimension_semantics<parallel>], iteration_bounds = array<i64: 1>, scalar_prefetch = 0 : i64, scratch_operands = 0 : i64, tpu.core_type = #tpu.core_type<tc>, window_params = [{transform_indices = @transform_0, window_bounds = array<i64: 3, 128>}, {pipeline_mode = #tpu.pipeline_mode<synchronous>, transform_indices = @transform_1, window_bounds = array<i64: 32, 3>}, {pipeline_mode = #tpu.pipeline_mode<synchronous>, transform_indices = @transform_2, window_bounds = array<i64: 32, 1>}, {pipeline_mode = #tpu.pipeline_mode<synchronous>, transform_indices = @transform_3, window_bounds = array<i64: 32, 32>}, {pipeline_mode = #tpu.pipeline_mode<synchronous>, transform_indices = @transform_4, window_bounds = array<i64: 32, 1>}, {pipeline_mode = #tpu.pipeline_mode<synchronous>, transform_indices = @transform_5, window_bounds = array<i64: 1, 32>}, {pipeline_mode = #tpu.pipeline_mode<synchronous>, transform_indices = @transform_6, window_bounds = array<i64: 1, 1>}, {transform_indices = @transform_7, window_bounds = array<i64: 1, 128>}]} {
    %c0 = arith.constant 0 : index
    %c0_0 = arith.constant 0 : index
    %0 = vector.load %arg1[%c0, %c0_0] : memref<3x128xf32, #tpu.memory_space<vmem>>, vector<3x128xf32>
    %c0_1 = arith.constant 0 : index
    %c0_2 = arith.constant 0 : index
    %1 = vector.load %arg2[%c0_1, %c0_2] : memref<32x3xf32, #tpu.memory_space<vmem>>, vector<32x3xf32>
    %2 = vector.extract_strided_slice %1 {offsets = [0, 0], sizes = [32, 1], strides = [1, 1]} : vector<32x3xf32> to vector<32x1xf32>
    %3 = vector.extract_strided_slice %0 {offsets = [0, 0], sizes = [1, 128], strides = [1, 1]} : vector<3x128xf32> to vector<1x128xf32>
    %4 = vector.broadcast %2 : vector<32x1xf32> to vector<32x128xf32>
    %5 = vector.broadcast %3 : vector<1x128xf32> to vector<32x128xf32>
    %6 = arith.mulf %4, %5 : vector<32x128xf32>
    %7 = vector.extract_strided_slice %1 {offsets = [0, 1], sizes = [32, 1], strides = [1, 1]} : vector<32x3xf32> to vector<32x1xf32>
    %8 = vector.extract_strided_slice %0 {offsets = [1, 0], sizes = [1, 128], strides = [1, 1]} : vector<3x128xf32> to vector<1x128xf32>
    %9 = vector.broadcast %7 : vector<32x1xf32> to vector<32x128xf32>
    %10 = vector.broadcast %8 : vector<1x128xf32> to vector<32x128xf32>
    %11 = arith.mulf %9, %10 : vector<32x128xf32>
    %12 = arith.addf %6, %11 : vector<32x128xf32>
    %13 = vector.extract_strided_slice %1 {offsets = [0, 2], sizes = [32, 1], strides = [1, 1]} : vector<32x3xf32> to vector<32x1xf32>
    %14 = vector.extract_strided_slice %0 {offsets = [2, 0], sizes = [1, 128], strides = [1, 1]} : vector<3x128xf32> to vector<1x128xf32>
    %15 = vector.broadcast %13 : vector<32x1xf32> to vector<32x128xf32>
    %16 = vector.broadcast %14 : vector<1x128xf32> to vector<32x128xf32>
    %17 = arith.mulf %15, %16 : vector<32x128xf32>
    %18 = arith.addf %12, %17 : vector<32x128xf32>
    %c0_3 = arith.constant 0 : index
    %c0_4 = arith.constant 0 : index
    %19 = vector.load %arg3[%c0_3, %c0_4] : memref<32x1xf32, #tpu.memory_space<vmem>>, vector<32x1xf32>
    %20 = vector.broadcast %19 : vector<32x1xf32> to vector<32x128xf32>
    %21 = arith.addf %18, %20 : vector<32x128xf32>
    %cst = arith.constant 0.000000e+00 : f32
    %22 = vector.broadcast %cst : f32 to vector<32x128xf32>
    %23 = arith.maximumf %21, %22 : vector<32x128xf32>
    %c0_5 = arith.constant 0 : index
    %c0_6 = arith.constant 0 : index
    %24 = vector.load %arg4[%c0_5, %c0_6] : memref<32x32xf32, #tpu.memory_space<vmem>>, vector<32x32xf32>
    %cst_7 = arith.constant dense<0.000000e+00> : vector<32x128xf32>
    %25 = tpu.matmul %24, %23, %cst_7 {dimension_numbers = #tpu.dot_dimension_numbers<[1], [0], [0], [1], [0, 0, 1, 1], [], []>} : vector<32x32xf32>, vector<32x128xf32>, vector<32x128xf32> -> vector<32x128xf32>
    %c0_8 = arith.constant 0 : index
    %c0_9 = arith.constant 0 : index
    %26 = vector.load %arg5[%c0_8, %c0_9] : memref<32x1xf32, #tpu.memory_space<vmem>>, vector<32x1xf32>
    %27 = vector.broadcast %26 : vector<32x1xf32> to vector<32x128xf32>
    %28 = arith.addf %25, %27 : vector<32x128xf32>
    %cst_10 = arith.constant 0.000000e+00 : f32
    %29 = vector.broadcast %cst_10 : f32 to vector<32x128xf32>
    %30 = arith.maximumf %28, %29 : vector<32x128xf32>
    %c0_11 = arith.constant 0 : index
    %c0_12 = arith.constant 0 : index
    %31 = vector.load %arg6[%c0_11, %c0_12] : memref<1x32xf32, #tpu.memory_space<vmem>>, vector<1x32xf32>
    %cst_13 = arith.constant dense<0.000000e+00> : vector<1x128xf32>
    %32 = tpu.matmul %31, %30, %cst_13 {dimension_numbers = #tpu.dot_dimension_numbers<[1], [0], [0], [1], [0, 0, 1, 1], [], []>} : vector<1x32xf32>, vector<32x128xf32>, vector<1x128xf32> -> vector<1x128xf32>
    %c0_14 = arith.constant 0 : index
    %c0_15 = arith.constant 0 : index
    %33 = vector.load %arg7[%c0_14, %c0_15] : memref<1x1xf32, #tpu.memory_space<vmem>>, vector<1x1xf32>
    %34 = vector.broadcast %33 : vector<1x1xf32> to vector<1x128xf32>
    %35 = arith.addf %32, %34 : vector<1x128xf32>
    %c0_16 = arith.constant 0 : index
    %c0_17 = arith.constant 0 : index
    %36 = vector.load %arg8[%c0_16, %c0_17] : memref<1x128xf32, #tpu.memory_space<vmem>>, vector<1x128xf32>
    tpu.vector_store %arg8[%c0_16, %c0_17], %35 {strides = array<i32>} : memref<1x128xf32, #tpu.memory_space<vmem>>, vector<1x128xf32>,
    return
  }
  func.func @transform_0(%arg0: i32) -> (i32, i32) {
    %c0_i32 = arith.constant 0 : i32
    %c0_i32_0 = arith.constant 0 : i32
    return %c0_i32, %arg0 : i32, i32
  }
  func.func @transform_1(%arg0: i32) -> (i32, i32) {
    %c0_i32 = arith.constant 0 : i32
    %c0_i32_0 = arith.constant 0 : i32
    %c0_i32_1 = arith.constant 0 : i32
    return %c0_i32, %c0_i32_0 : i32, i32
  }
  func.func @transform_2(%arg0: i32) -> (i32, i32) {
    %c0_i32 = arith.constant 0 : i32
    %c0_i32_0 = arith.constant 0 : i32
    %c0_i32_1 = arith.constant 0 : i32
    return %c0_i32, %c0_i32_0 : i32, i32
  }
  func.func @transform_3(%arg0: i32) -> (i32, i32) {
    %c0_i32 = arith.constant 0 : i32
    %c0_i32_0 = arith.constant 0 : i32
    %c0_i32_1 = arith.constant 0 : i32
    return %c0_i32, %c0_i32_0 : i32, i32
  }
  func.func @transform_4(%arg0: i32) -> (i32, i32) {
    %c0_i32 = arith.constant 0 : i32
    %c0_i32_0 = arith.constant 0 : i32
    %c0_i32_1 = arith.constant 0 : i32
    return %c0_i32, %c0_i32_0 : i32, i32
  }
  func.func @transform_5(%arg0: i32) -> (i32, i32) {
    %c0_i32 = arith.constant 0 : i32
    %c0_i32_0 = arith.constant 0 : i32
    %c0_i32_1 = arith.constant 0 : i32
    return %c0_i32, %c0_i32_0 : i32, i32
  }
  func.func @transform_6(%arg0: i32) -> (i32, i32) {
    %c0_i32 = arith.constant 0 : i32
    %c0_i32_0 = arith.constant 0 : i32
    %c0_i32_1 = arith.constant 0 : i32
    return %c0_i32, %c0_i32_0 : i32, i32
  }
  func.func @transform_7(%arg0: i32) -> (i32, i32) {
    %c0_i32 = arith.constant 0 : i32
    %c0_i32_0 = arith.constant 0 : i32
    return %c0_i32, %arg0 : i32, i32
  }
}

</mosaic_0001>

<llo_original>
// kernel: network_forward.1
$region0: #{network_forward.1}
  #allocation0 [shape = 'u32[]', space=smem, size = 0x4, offset = 0x4, fixed_abs, tag = 'smem constant byte address 0x4 - core index']
  #allocation1 [shape = 'u32[72,128]{1,0:T(1,128)}', space=vmem, size = 0x9000, scoped, tag = 'internal scratch']
  #allocation2 [shape = 'f32[1,1]{1,0:T(1,128)S(1)}', space=vmem, size = 0x200, scoped, tag = 'scoped memory for network_forward.1']
  %s0 = inlined_call_operand.vmem [shape: f32[3,128], index: 0, kind: input, shape index: {}]
  %s1 = inlined_call_operand.vmem [shape: f32[32,3], index: 1, kind: input, shape index: {}]
  %s2 = inlined_call_operand.vmem [shape: f32[32,1], index: 2, kind: input, shape index: {}]
  %s3 = inlined_call_operand.vmem [shape: f32[32,32], index: 3, kind: input, shape index: {}]
  %s4 = inlined_call_operand.vmem [shape: f32[32,1], index: 4, kind: input, shape index: {}]
  %s5 = inlined_call_operand.vmem [shape: f32[1,32], index: 5, kind: input, shape index: {}]
  %s6 = inlined_call_operand.<no memory space> [shape: f32[1,1], index: 6, kind: input, shape index: {}]
  %s7 = inlined_call_operand.vmem [shape: f32[1,128], index: 7, kind: output, shape index: {}]
  %s8 = sld [smem:[#allocation0]]
  $region38: #{network_forward.1} parent=0
    _
  %s10 = ssub.s32 1, %s8
  %s11 = scalar_select 0, %s10, %s8
  %v12 = vstv %s6
  %13 = vst [vmem:[#allocation2] sm:$0x1] %v12
  // Predicated region
  $region2: #{network_forward.1} parent=0 // pred_check
    _
  $region3: #{network_forward.1} parent=0 // pred_check_branch
    %15 = sbr.rel (0) target = $region5
  $region4: #{network_forward.1} parent=0 // pred_region
    _
  $region5: #{network_forward.1} parent=0 // pred_fallthru
    _
  // Predicated region
  $region6: #{network_forward.1} parent=0 // pred_check
    _
  $region7: #{network_forward.1} parent=0 // pred_check_branch
    %17 = sbr.rel (0) target = $region9
  $region8: #{network_forward.1} parent=0 // pred_region
    _
  $region9: #{network_forward.1} parent=0 // pred_fallthru
    _
  // Predicated region
  $region10: #{network_forward.1} parent=0 // pred_check
    _
  $region11: #{network_forward.1} parent=0 // pred_check_branch
    %19 = sbr.rel (0) target = $region13
  $region12: #{network_forward.1} parent=0 // pred_region
    _
  $region13: #{network_forward.1} parent=0 // pred_fallthru
    _
  // Predicated region
  $region14: #{network_forward.1} parent=0 // pred_check
    _
  $region15: #{network_forward.1} parent=0 // pred_check_branch
    %21 = sbr.rel (0) target = $region17
  $region16: #{network_forward.1} parent=0 // pred_region
    _
  $region17: #{network_forward.1} parent=0 // pred_fallthru
    _
  // Predicated region
  $region18: #{network_forward.1} parent=0 // pred_check
    _
  $region19: #{network_forward.1} parent=0 // pred_check_branch
    %23 = sbr.rel (0) target = $region21
  $region20: #{network_forward.1} parent=0 // pred_region
    _
  $region21: #{network_forward.1} parent=0 // pred_fallthru
    _
  // Predicated region
  $region22: #{network_forward.1} parent=0 // pred_check
    _
  $region23: #{network_forward.1} parent=0 // pred_check_branch
    %25 = sbr.rel (0) target = $region25
  $region24: #{network_forward.1} parent=0 // pred_region
    _
  $region25: #{network_forward.1} parent=0 // pred_fallthru
    _
  // Predicated region
  $region26: #{network_forward.1} parent=0 // pred_check
    _
  $region27: #{network_forward.1} parent=0 // pred_check_branch
    %27 = sbr.rel (0) target = $region29
  $region28: #{network_forward.1} parent=0 // pred_region
    _
  $region29: #{network_forward.1} parent=0 // pred_fallthru
    _
  %v28 = vld [vmem:[%s0] sm:$0x7]
  %v29 = vld [vmem:[%s1] sm:$0xff]
  %v30 = vld [vmem:[%s1 + $0x8] sm:$0xff]
  %v31 = vld [vmem:[%s1 + $0x10] sm:$0xff]
  %v32 = vld [vmem:[%s1 + $0x18] sm:$0xff]
  %34 = vset.pattern.permute.xlu0 0
  %35 = vperm.xlu0 %34, %v29
  %v36 = vpop.permute.xlu0 %35
  %39 = vset.pattern.permute.xlu0 0
  %40 = vperm.xlu0 %39, %v30
  %v41 = vpop.permute.xlu0 %40
  %44 = vset.pattern.permute.xlu0 0
  %45 = vperm.xlu0 %44, %v31
  %v46 = vpop.permute.xlu0 %45
  %49 = vset.pattern.permute.xlu0 0
  %50 = vperm.xlu0 %49, %v32
  %v51 = vpop.permute.xlu0 %50
  %v53 = vperm.slane %v28, 0
  %v54 = vmul.f32 %v36, %v53
  %v55 = vmul.f32 %v41, %v53
  %v56 = vmul.f32 %v46, %v53
  %v57 = vmul.f32 %v51, %v53
  %58 = vset.pattern.permute.xlu0 1
  %59 = vperm.xlu0 %58, %v29
  %v60 = vpop.permute.xlu0 %59
  %62 = vset.pattern.permute.xlu0 1
  %63 = vperm.xlu0 %62, %v30
  %v64 = vpop.permute.xlu0 %63
  %66 = vset.pattern.permute.xlu0 1
  %67 = vperm.xlu0 %66, %v31
  %v68 = vpop.permute.xlu0 %67
  %70 = vset.pattern.permute.xlu0 1
  %71 = vperm.xlu0 %70, %v32
  %v72 = vpop.permute.xlu0 %71
  %v74 = vperm.slane %v28, 1
  %v75 = vmul.f32 %v60, %v74
  %v76 = vmul.f32 %v64, %v74
  %v77 = vmul.f32 %v68, %v74
  %v78 = vmul.f32 %v72, %v74
  %v79 = vadd.f32 %v54, %v75
  %v80 = vadd.f32 %v55, %v76
  %v81 = vadd.f32 %v56, %v77
  %v82 = vadd.f32 %v57, %v78
  %83 = vset.pattern.permute.xlu0 2
  %84 = vperm.xlu0 %83, %v29
  %v85 = vpop.permute.xlu0 %84
  %87 = vset.pattern.permute.xlu0 2
  %88 = vperm.xlu0 %87, %v30
  %v89 = vpop.permute.xlu0 %88
  %91 = vset.pattern.permute.xlu0 2
  %92 = vperm.xlu0 %91, %v31
  %v93 = vpop.permute.xlu0 %92
  %95 = vset.pattern.permute.xlu0 2
  %96 = vperm.xlu0 %95, %v32
  %v97 = vpop.permute.xlu0 %96
  %v99 = vperm.slane %v28, 2
  %v100 = vmul.f32 %v85, %v99
  %v101 = vmul.f32 %v89, %v99
  %v102 = vmul.f32 %v93, %v99
  %v103 = vmul.f32 %v97, %v99
  %v104 = vadd.f32 %v79, %v100
  %v105 = vadd.f32 %v80, %v101
  %v106 = vadd.f32 %v81, %v102
  %v107 = vadd.f32 %v82, %v103
  %v108 = vld [vmem:[%s2] sm:$0xff]
  %v109 = vld [vmem:[%s2 + $0x8] sm:$0xff]
  %v110 = vld [vmem:[%s2 + $0x10] sm:$0xff]
  %v111 = vld [vmem:[%s2 + $0x18] sm:$0xff]
  %113 = vset.pattern.permute.xlu0 0
  %114 = vperm.xlu0 %113, %v108
  %v115 = vpop.permute.xlu0 %114
  %118 = vset.pattern.permute.xlu0 0
  %119 = vperm.xlu0 %118, %v109
  %v120 = vpop.permute.xlu0 %119
  %123 = vset.pattern.permute.xlu0 0
  %124 = vperm.xlu0 %123, %v110
  %v125 = vpop.permute.xlu0 %124
  %128 = vset.pattern.permute.xlu0 0
  %129 = vperm.xlu0 %128, %v111
  %v130 = vpop.permute.xlu0 %129
  %v132 = vadd.f32 %v104, %v115
  %v133 = vadd.f32 %v105, %v120
  %v134 = vadd.f32 %v106, %v125
  %v135 = vadd.f32 %v107, %v130
  %v136 = vmax.f32 %v132, 0.0
  %v137 = vmax.f32 %v133, 0.0
  %v138 = vmax.f32 %v134, 0.0
  %v139 = vmax.f32 %v135, 0.0
  %v140 = vld [vmem:[%s3] sm:$0xff]
  %v141 = vld [vmem:[%s3 + $0x8] sm:$0xff]
  %v142 = vld [vmem:[%s3 + $0x10] sm:$0xff]
  %v143 = vld [vmem:[%s3 + $0x18] sm:$0xff]
  %v144 = vld [vmem:[%s4] sm:$0xff]
  %v145 = vld [vmem:[%s4 + $0x8] sm:$0xff]
  %v146 = vld [vmem:[%s4 + $0x10] sm:$0xff]
  %v147 = vld [vmem:[%s4 + $0x18] sm:$0xff]
  %149 = vset.pattern.permute.xlu0 0
  %150 = vperm.xlu0 %149, %v144
  %v151 = vpop.permute.xlu0 %150
  %154 = vset.pattern.permute.xlu0 0
  %155 = vperm.xlu0 %154, %v145
  %v156 = vpop.permute.xlu0 %155
  %159 = vset.pattern.permute.xlu0 0
  %160 = vperm.xlu0 %159, %v146
  %v161 = vpop.permute.xlu0 %160
  %164 = vset.pattern.permute.xlu0 0
  %165 = vperm.xlu0 %164, %v147
  %v166 = vpop.permute.xlu0 %165
  %vm168 = vcmask 261120
  %v170 = vsel %vm168, %v140, 0
  %v173 = vsel %vm168, %v141, 0
  %v176 = vsel %vm168, %v142, 0
  %v179 = vsel %vm168, %v143, 0
  %181 = vmatpush.msra.mxu0 0.0
  %182 = vmatpush.msra.mxu0 0.0
  %183 = vmatpush.msra.mxu0 0.0
  %184 = vmatpush.msra.mxu0 0.0
  %185 = vmatpush.msra.mxu0 0.0
  %186 = vmatpush.msra.mxu0 0.0
  %187 = vmatpush.msra.mxu0 0.0
  %188 = vmatpush.msra.mxu0 0.0
  %189 = vmatpush.msra.mxu0 0.0
  %190 = vmatpush.msra.mxu0 0.0
  %191 = vmatpush.msra.mxu0 0.0
  %192 = vmatpush.msra.mxu0 0.0
  %193 = vmatpush.msra.mxu0 %v139
  %194 = vmatpush.msra.mxu0 %v138
  %195 = vmatpush.msra.mxu0 %v137
  %196 = vmatpush.msra.mxu0 %v136
  %197 = vmatmul.f32.gmra.mxu0 %v170
  %v198 = vpop.f32.mrf.mxu0
  %v199 = vadd.f32 %v151, %v198
  %200 = vmatmul.f32.gmra.mxu0 %v173
  %v201 = vpop.f32.mrf.mxu0
  %v202 = vadd.f32 %v156, %v201
  %203 = vmatmul.f32.gmra.mxu0 %v176
  %v204 = vpop.f32.mrf.mxu0
  %v205 = vadd.f32 %v161, %v204
  %206 = vmatmul.f32.gmra.mxu0 %v179
  %v207 = vpop.f32.mrf.mxu0
  %v208 = vadd.f32 %v166, %v207
  %209 = vdwg.mxu0
  %v210 = vmax.f32 %v199, 0.0
  %v211 = vmax.f32 %v202, 0.0
  %v212 = vmax.f32 %v205, 0.0
  %v213 = vmax.f32 %v208, 0.0
  %v214 = vld [vmem:[%s5] sm:$0x1]
  %v215 = vld [vmem:[#allocation2] sm:$0x1]
  %217 = vset.pattern.permute.xlu0 0
  %218 = vperm.xlu0 %217, %v215
  %v219 = vpop.permute.xlu0 %218
  %v221 = vperm.slane %v219, 0
  %v223 = vsel %vm168, %v214, 0
  %225 = vmatpush.msra.mxu0 0.0
  %226 = vmatpush.msra.mxu0 0.0
  %227 = vmatpush.msra.mxu0 0.0
  %228 = vmatpush.msra.mxu0 0.0
  %229 = vmatpush.msra.mxu0 0.0
  %230 = vmatpush.msra.mxu0 0.0
  %231 = vmatpush.msra.mxu0 0.0
  %232 = vmatpush.msra.mxu0 0.0
  %233 = vmatpush.msra.mxu0 0.0
  %234 = vmatpush.msra.mxu0 0.0
  %235 = vmatpush.msra.mxu0 0.0
  %236 = vmatpush.msra.mxu0 0.0
  %237 = vmatpush.msra.mxu0 %v213
  %238 = vmatpush.msra.mxu0 %v212
  %239 = vmatpush.msra.mxu0 %v211
  %240 = vmatpush.msra.mxu0 %v210
  %241 = vmatmul.f32.gmra.mxu0 %v223
  %v242 = vpop.f32.mrf.mxu0
  %v243 = vadd.f32 %v221, %v242
  %244 = vdwg.mxu0
  %245 = vst [vmem:[%s7] sm:$0x1] %v243
  // Predicated region
  $region30: #{network_forward.1} parent=0 // pred_check
    _
  $region31: #{network_forward.1} parent=0 // pred_check_branch
    %247 = sbr.rel (0) target = $region33
  $region32: #{network_forward.1} parent=0 // pred_region
    _
  $region33: #{network_forward.1} parent=0 // pred_fallthru
    _
  // Predicated region
  $region34: #{network_forward.1} parent=0 // pred_check
    _
  $region35: #{network_forward.1} parent=0 // pred_check_branch
    %249 = sbr.rel (0) target = $region37
  $region36: #{network_forward.1} parent=0 // pred_region
    _
  $region37: #{network_forward.1} parent=0 // pred_fallthru
    _

</llo_original>
